<compile_context>
chip_gen: v7x
topology: tpu7x:2x2x1
jax: 0.10.0
libtpu: 0.0.40
codegen_flags: <defaults>
</compile_context>

<pallas_src>
import functools

import jax
import jax.numpy as jnp
from jax.experimental import pallas as pl
from jax.experimental.pallas import tpu as pltpu


def _ce_label_smooth_kernel(logits_ref, targets_ref, loss_ref,
                            *, epsilon: float, num_classes: int):
    """Fused, simplified smoothed cross-entropy for one (TB, C) batch tile.

    logits_ref : (TB, C) float  — VMEM tile of pre-softmax logits
    targets_ref: (TB, 1) int32  — VMEM tile of class labels
    loss_ref   : (TB, 1) f32    — per-sample loss output tile
    """
    x = logits_ref[...].astype(jnp.float32)                      # (TB, C)
    tb, c = x.shape

    # Numerically-stable pieces of log-softmax over the class axis.
    m = jnp.max(x, axis=1, keepdims=True)                        # (TB, 1)
    shifted = x - m                                               # (TB, C)
    lse = jnp.log(jnp.sum(jnp.exp(shifted), axis=1, keepdims=True))  # (TB, 1)

    # shifted[target] via a masked row-sum (no float one-hot materialized
    # beyond the select), plus the plain row-sum for the uniform-smoothing term.
    t = targets_ref[...]                                          # (TB, 1) int32
    cls = jax.lax.broadcasted_iota(jnp.int32, (tb, c), 1)
    x_t = jnp.sum(jnp.where(cls == t, shifted, 0.0), axis=1, keepdims=True)
    s_sum = jnp.sum(shifted, axis=1, keepdims=True)

    # loss = lse - (1-eps)*shifted[target] - (eps/K) * sum_c shifted
    loss_ref[...] = (lse
                     - (1.0 - epsilon) * x_t
                     - (epsilon / num_classes) * s_sum)


def _choose_tile_rows(batch: int, num_classes: int, itemsize: int,
                      budget_bytes: int = 24 << 20, max_tb: int = 1024) -> int:
    """Largest multiple-of-8 row tile whose double-buffered input fits budget."""
    tb = budget_bytes // max(1, 2 * num_classes * itemsize)
    tb = max(8, min(max_tb, (tb // 8) * 8))
    b_pad8 = ((batch + 7) // 8) * 8
    return min(tb, b_pad8)


def cross_entropy_label_smooth(logits, targets, *, num_classes,
                               epsilon=0.1, reduction=True):
    """JAX wrapper matching CrossEntropyLabelSmooth.forward semantics.

    logits : (B, num_classes) float array (pre-softmax), f32 or bf16
    targets: (B,) integer class labels
    """
    B, C = logits.shape
    assert C == num_classes

    itemsize = jnp.dtype(logits.dtype).itemsize
    TB = _choose_tile_rows(B, C, itemsize)
    B_pad = ((B + TB - 1) // TB) * TB
    n_tiles = B_pad // TB

    # Pad batch to a TB multiple; padded rows are computed then discarded.
    logits_p = logits
    targets_2d = targets.astype(jnp.int32).reshape(B, 1)
    if B_pad != B:
        logits_p = jnp.pad(logits, ((0, B_pad - B), (0, 0)))
        targets_2d = jnp.pad(targets_2d, ((0, B_pad - B), (0, 0)))

    # VMEM budget: 2x double-buffered logits tile + tiny targets/loss columns.
    vmem_needed = (2 * TB * C * itemsize) + (4 * TB * 4) + (2 << 20)
    vmem_limit = int(min(48 << 20, max(vmem_needed, 16 << 20)))

    kernel = functools.partial(_ce_label_smooth_kernel,
                               epsilon=float(epsilon),
                               num_classes=int(num_classes))

    per_sample = pl.pallas_call(
        kernel,
        out_shape=jax.ShapeDtypeStruct((B_pad, 1), jnp.float32),
        grid=(n_tiles,),
        in_specs=[
            pl.BlockSpec((TB, C), lambda i: (i, 0)),
            pl.BlockSpec((TB, 1), lambda i: (i, 0)),
        ],
        out_specs=pl.BlockSpec((TB, 1), lambda i: (i, 0)),
        compiler_params=pltpu.CompilerParams(
            dimension_semantics=("parallel",),
            vmem_limit_bytes=vmem_limit,
        ),
    )(logits_p, targets_2d)

    per_sample = per_sample[:B, 0]
    if reduction:
        return jnp.sum(per_sample) / B
    return per_sample


def _reference(logits, targets, num_classes, epsilon=0.1, reduction=True):
    """Pure-JAX reference for correctness checking."""
    log_probs = jax.nn.log_softmax(logits.astype(jnp.float32), axis=1)
    one_hot = jax.nn.one_hot(targets, num_classes, dtype=jnp.float32)
    smoothed = (1.0 - epsilon) * one_hot + epsilon / num_classes
    loss = jnp.sum(-smoothed * log_probs, axis=1)
    return jnp.mean(loss) if reduction else loss


if __name__ == "__main__":
    key = jax.random.PRNGKey(0)
    k_logits, k_targets = jax.random.split(key)

    batch = 8
    num_classes = 16

    logits = jax.random.normal(k_logits, (batch, num_classes), dtype=jnp.float32)
    targets = jax.random.randint(k_targets, (batch,), 0, num_classes,
                                 dtype=jnp.int32)

    # reduction=True (scalar mean loss)
    loss_mean = cross_entropy_label_smooth(
        logits, targets, num_classes=num_classes, epsilon=0.1, reduction=True)
    loss_mean = jax.block_until_ready(loss_mean)

    # reduction=False (per-sample loss)
    loss_vec = cross_entropy_label_smooth(
        logits, targets, num_classes=num_classes, epsilon=0.1, reduction=False)
    loss_vec = jax.block_until_ready(loss_vec)

    ref_mean = _reference(logits, targets, num_classes, 0.1, True)
    ref_vec = _reference(logits, targets, num_classes, 0.1, False)

    assert jnp.allclose(loss_mean, ref_mean, atol=1e-5, rtol=1e-5)
    assert jnp.allclose(loss_vec, ref_vec, atol=1e-5, rtol=1e-5)

    # Also exercise a non-trivial grid (multiple batch tiles + padding path).
    batch2 = 37
    logits2 = jax.random.normal(jax.random.PRNGKey(1), (batch2, num_classes),
                                dtype=jnp.float32)
    targets2 = jax.random.randint(jax.random.PRNGKey(2), (batch2,), 0,
                                  num_classes, dtype=jnp.int32)
    got2 = jax.block_until_ready(cross_entropy_label_smooth(
        logits2, targets2, num_classes=num_classes, epsilon=0.1,
        reduction=False))
    ref2 = _reference(logits2, targets2, num_classes, 0.1, False)
    assert jnp.allclose(got2, ref2, atol=1e-5, rtol=1e-5)

    print("KERNEL_OK")
</pallas_src>

<mosaic_0001>
module attributes {stable_mosaic.version = 11 : i64} {
  func.func @_ce_label_smooth_kernel(%arg0: i32, %arg1: memref<8x16xf32, #tpu.memory_space<vmem>>, %arg2: memref<8x1xi32, #tpu.memory_space<vmem>>, %arg3: memref<8x1xf32, #tpu.memory_space<vmem>>) attributes {dimension_semantics = [#tpu.dimension_semantics<parallel>], iteration_bounds = array<i64: 1>, scalar_prefetch = 0 : i64, scratch_operands = 0 : i64, tpu.core_type = #tpu.core_type<tc>, window_params = [{transform_indices = @transform_0, window_bounds = array<i64: 8, 16>}, {transform_indices = @transform_1, window_bounds = array<i64: 8, 1>}, {transform_indices = @transform_2, window_bounds = array<i64: 8, 1>}]} {
    %c0 = arith.constant 0 : index
    %c0_0 = arith.constant 0 : index
    %0 = vector.load %arg1[%c0, %c0_0] : memref<8x16xf32, #tpu.memory_space<vmem>>, vector<8x16xf32>
    %cst = arith.constant dense<0xFF800000> : vector<8xf32>
    %1 = vector.multi_reduction <maximumf>, %0, %cst [1] : vector<8x16xf32> to vector<8xf32>
    %2 = vector.shape_cast %1 : vector<8xf32> to vector<8x1xf32>
    %3 = vector.broadcast %2 : vector<8x1xf32> to vector<8x16xf32>
    %4 = arith.subf %0, %3 : vector<8x16xf32>
    %5 = math.exp %4 : vector<8x16xf32>
    %cst_1 = arith.constant dense<0.000000e+00> : vector<8xf32>
    %6 = vector.multi_reduction <add>, %5, %cst_1 [1] : vector<8x16xf32> to vector<8xf32>
    %7 = vector.shape_cast %6 : vector<8xf32> to vector<8x1xf32>
    %8 = math.log %7 : vector<8x1xf32>
    %c0_2 = arith.constant 0 : index
    %c0_3 = arith.constant 0 : index
    %9 = vector.load %arg2[%c0_2, %c0_3] : memref<8x1xi32, #tpu.memory_space<vmem>>, vector<8x1xi32>
    %10 = tpu.iota {dimensions = array<i32: 1>} : vector<8x16xi32>
    %11 = vector.broadcast %9 : vector<8x1xi32> to vector<8x16xi32>
    %12 = arith.cmpi eq, %10, %11 : vector<8x16xi32>
    %cst_4 = arith.constant 0.000000e+00 : f32
    %13 = vector.broadcast %cst_4 : f32 to vector<8x16xf32>
    %14 = arith.select %12, %4, %13 : vector<8x16xi1>, vector<8x16xf32>
    %cst_5 = arith.constant dense<0.000000e+00> : vector<8xf32>
    %15 = vector.multi_reduction <add>, %14, %cst_5 [1] : vector<8x16xf32> to vector<8xf32>
    %16 = vector.shape_cast %15 : vector<8xf32> to vector<8x1xf32>
    %cst_6 = arith.constant dense<0.000000e+00> : vector<8xf32>
    %17 = vector.multi_reduction <add>, %4, %cst_6 [1] : vector<8x16xf32> to vector<8xf32>
    %18 = vector.shape_cast %17 : vector<8xf32> to vector<8x1xf32>
    %cst_7 = arith.constant 0.899999976 : f32
    %19 = vector.broadcast %cst_7 : f32 to vector<8x1xf32>
    %20 = arith.mulf %19, %16 : vector<8x1xf32>
    %21 = arith.subf %8, %20 : vector<8x1xf32>
    %cst_8 = arith.constant 6.250000e-03 : f32
    %22 = vector.broadcast %cst_8 : f32 to vector<8x1xf32>
    %23 = arith.mulf %22, %18 : vector<8x1xf32>
    %24 = arith.subf %21, %23 : vector<8x1xf32>
    %c0_9 = arith.constant 0 : index
    %c0_10 = arith.constant 0 : index
    %25 = vector.load %arg3[%c0_9, %c0_10] : memref<8x1xf32, #tpu.memory_space<vmem>>, vector<8x1xf32>
    tpu.vector_store %arg3[%c0_9, %c0_10], %24 {strides = array<i32>} : memref<8x1xf32, #tpu.memory_space<vmem>>, vector<8x1xf32>,
    return
  }
  func.func @transform_0(%arg0: i32) -> (i32, i32) {
    %c0_i32 = arith.constant 0 : i32
    %c0_i32_0 = arith.constant 0 : i32
    return %arg0, %c0_i32 : i32, i32
  }
  func.func @transform_1(%arg0: i32) -> (i32, i32) {
    %c0_i32 = arith.constant 0 : i32
    %c0_i32_0 = arith.constant 0 : i32
    return %arg0, %c0_i32 : i32, i32
  }
  func.func @transform_2(%arg0: i32) -> (i32, i32) {
    %c0_i32 = arith.constant 0 : i32
    %c0_i32_0 = arith.constant 0 : i32
    return %arg0, %c0_i32 : i32, i32
  }
}

</mosaic_0001>

<llo_original>
// kernel: tpu_custom_call.1
$region0: #{tpu_custom_call.1}
  #allocation0 [shape = 'u32[]', space=smem, size = 0x4, offset = 0x4, fixed_abs, tag = 'smem constant byte address 0x4 - core index']
  #allocation1 [shape = 'u32[144,128]{1,0:T(1,128)}', space=vmem, size = 0x12000, scoped, tag = 'internal scratch']
  %s0 = inlined_call_operand.vmem [shape: f32[8,16], index: 0, kind: input, shape index: {}]
  %s1 = inlined_call_operand.vmem [shape: s32[8,1], index: 1, kind: input, shape index: {}]
  %s2 = inlined_call_operand.vmem [shape: f32[8,1], index: 2, kind: output, shape index: {}]
  %s3 = sld [smem:[#allocation0]]
  $region18: #{tpu_custom_call.1} parent=0
    _
  %s5 = ssub.s32 1, %s3
  %s6 = scalar_select 0, %s5, %s3
  // Predicated region
  $region2: #{tpu_custom_call.1} parent=0 // pred_check
    _
  $region3: #{tpu_custom_call.1} parent=0 // pred_check_branch
    %8 = sbr.rel (0) target = $region5
  $region4: #{tpu_custom_call.1} parent=0 // pred_region
    _
  $region5: #{tpu_custom_call.1} parent=0 // pred_fallthru
    _
  // Predicated region
  $region6: #{tpu_custom_call.1} parent=0 // pred_check
    _
  $region7: #{tpu_custom_call.1} parent=0 // pred_check_branch
    %10 = sbr.rel (0) target = $region9
  $region8: #{tpu_custom_call.1} parent=0 // pred_region
    _
  $region9: #{tpu_custom_call.1} parent=0 // pred_fallthru
    _
  %v11 = vld [vmem:[%s0] sm:$0xff]
  %vm12 = vcmask 130048
  %v13 = vsel %vm12, %v11, -inf
  %14 = vmax.xlane.f32.xlu0 %v13
  %v15 = vpop.xlane.xlu0 %14
  %v16 = vsub.f32 %v11, %v15
  %v17 = vmul.f32 %v16, 1.442695
  %v18 = vpow.pop %v17
  %v19 = vsel %vm12, %v18, 0.0
  %20 = vadd.xlane.f32.xlu0 %v19
  %v21 = vpop.xlane.xlu0 %20
  %v22 = vlog2.pop %v21
  %v23 = vmul.f32 %v22, 0.6931472
  %v24 = vld [vmem:[%s1] sm:$0xff]
  %v25 = vlaneseq
  %v26 = vand.u32 %v25, 127
  %27 = vset.pattern.permute.xlu0 0
  %28 = vperm.xlu0 %27, %v24
  %v29 = vpop.permute.xlu0 %28
  %vm30 = vcmp.eq.s32.totalorder %v26, %v29
  %v31 = vsel %vm30, %v16, 0.0
  %v32 = vsel %vm12, %v31, 0.0
  %33 = vadd.xlane.f32.xlu0 %v32
  %v34 = vpop.xlane.xlu0 %33
  %v35 = vsel %vm12, %v16, 0.0
  %36 = vadd.xlane.f32.xlu0 %v35
  %v37 = vpop.xlane.xlu0 %36
  %v38 = vmul.f32 %v34, 0.9
  %v39 = vsub.f32 %v23, %v38
  %v40 = vmul.f32 %v37, 0.00625
  %v41 = vsub.f32 %v39, %v40
  %vm42 = vcmask 7168
  %43 = vst.msk [vmem:[%s2] sm:$0xff] %vm42, %v41
  // Predicated region
  $region10: #{tpu_custom_call.1} parent=0 // pred_check
    _
  $region11: #{tpu_custom_call.1} parent=0 // pred_check_branch
    %45 = sbr.rel (0) target = $region13
  $region12: #{tpu_custom_call.1} parent=0 // pred_region
    _
  $region13: #{tpu_custom_call.1} parent=0 // pred_fallthru
    _
  // Predicated region
  $region14: #{tpu_custom_call.1} parent=0 // pred_check
    _
  $region15: #{tpu_custom_call.1} parent=0 // pred_check_branch
    %47 = sbr.rel (0) target = $region17
  $region16: #{tpu_custom_call.1} parent=0 // pred_region
    _
  $region17: #{tpu_custom_call.1} parent=0 // pred_fallthru
    _

</llo_original>
